<compile_context>
chip_gen: v7x
topology: tpu7x:2x2x1
jax: 0.10.0
libtpu: 0.0.40
codegen_flags: <defaults>
</compile_context>

<pallas_src>
import jax
import jax.numpy as jnp
from jax import lax
from jax.experimental import pallas as pl
from jax.experimental.pallas import tpu as pltpu


def _round_up(x, m):
    return ((x + m - 1) // m) * m


# -----------------------------------------------------------------------------
# Kernel 1: FeatureResizer  —  y = LayerNorm(x @ W + b) * gamma + beta
# -----------------------------------------------------------------------------
def _resizer_kernel(x_ref, w_ref, p_ref, o_ref):
    # Matmul in the operands' native dtype (bf16 feeds the MXU at full rate);
    # accumulate + LayerNorm math in f32.
    y = jnp.dot(x_ref[...], w_ref[...], preferred_element_type=jnp.float32)  # (TM, C2)
    p = p_ref[...].astype(jnp.float32)                                       # (3, C2)
    y = y + p[0:1, :]                                                        # bias
    mean = jnp.mean(y, axis=-1, keepdims=True)
    var = jnp.mean(jnp.square(y - mean), axis=-1, keepdims=True)
    y = (y - mean) * lax.rsqrt(var + 1e-12)                                  # eps=1e-12
    y = y * p[1:2, :] + p[2:3, :]                                            # gamma/beta
    # TODO(synk): nn.Dropout(0.1) is identity in eval; training-mode dropout would use
    #             pltpu.prng_seed / stateful_bernoulli here.
    o_ref[...] = y.astype(o_ref.dtype)


def feature_resizer(x, w, b, gamma, beta, *, max_tile_rows=256):
    """x: (L, C1) -> (L, C2).  Equivalent to FeatureResizer.forward in eval mode.

    `w` is stored (C_in, C_out), i.e. transposed w.r.t. torch.nn.Linear.weight.
    """
    L, C1 = x.shape
    C2 = w.shape[1]
    # Big row tile: whole (padded) L when it is small, 128-row tiles otherwise.
    if L <= max_tile_rows:
        TM = _round_up(L, 8)
    else:
        TM = 128
    L_pad = _round_up(L, TM)
    x_p = jnp.pad(x, ((0, L_pad - L), (0, 0))) if L_pad != L else x
    params = jnp.stack([b, gamma, beta]).astype(jnp.float32)   # (3, C2), single DMA

    out = pl.pallas_call(
        _resizer_kernel,
        out_shape=jax.ShapeDtypeStruct((L_pad, C2), x.dtype),
        grid=(L_pad // TM,),
        in_specs=[
            pl.BlockSpec((TM, C1), lambda i: (i, 0)),
            pl.BlockSpec((C1, C2), lambda i: (0, 0)),
            pl.BlockSpec((3, C2), lambda i: (0, 0)),
        ],
        out_specs=pl.BlockSpec((TM, C2), lambda i: (i, 0)),
        compiler_params=pltpu.CompilerParams(dimension_semantics=("parallel",)),
    )(x_p, w, params)
    return out[:L] if L_pad != L else out


# -----------------------------------------------------------------------------
# Kernel 2: per-mask sigmoid-BCE mean + dice, tiled over the spatial axis
# -----------------------------------------------------------------------------
def _make_mask_loss_kernel(hw, tcol, need_mask):
    """Per-mask reductions for BCE-with-logits mean and dice (scale=1000, eps=1e-6)."""
    inv_hw = 1.0 / float(hw)   # mean over H*W becomes a single multiply

    def kernel(pred_ref, gt_ref, bce_out_ref, dice_out_ref,
               bce_acc, st_acc, s_acc, t_acc):
        j = pl.program_id(1)

        @pl.when(j == 0)
        def _():
            bce_acc[...] = jnp.zeros_like(bce_acc)
            st_acc[...] = jnp.zeros_like(st_acc)
            s_acc[...] = jnp.zeros_like(s_acc)
            t_acc[...] = jnp.zeros_like(t_acc)

        x = pred_ref[...].astype(jnp.float32)   # (TN, TCOL) logits
        t = gt_ref[...].astype(jnp.float32)     # (TN, TCOL) binary targets

        # One exp per element, shared between BCE and sigmoid (EUP is the tight slot).
        e = jnp.exp(-jnp.abs(x))
        bce = jnp.maximum(x, 0.0) - x * t + jnp.log1p(e)
        r = 1.0 / (1.0 + e)
        sig = jnp.where(x >= 0.0, r, e * r)     # exact sigmoid from the shared exp

        # Replace the /scale divisions with multiplies by 1e-3.
        sig_s = sig * jnp.float32(1e-3)
        t_s = t * jnp.float32(1e-3)

        if need_mask:
            # Column padding past the true H*W: zero out bce and sigmoid contributions
            # (targets are zero-padded, so t_s and sig_s*t need no extra masking).
            col = lax.broadcasted_iota(jnp.int32, x.shape, 1) + j * tcol
            valid = col < hw
            bce = jnp.where(valid, bce, 0.0)
            sig_s = jnp.where(valid, sig_s, 0.0)

        bce_acc[...] += jnp.sum(bce, axis=-1, keepdims=True)
        st_acc[...] += jnp.sum(sig_s * t, axis=-1, keepdims=True)
        s_acc[...] += jnp.sum(sig_s, axis=-1, keepdims=True)
        t_acc[...] += jnp.sum(t_s, axis=-1, keepdims=True)

        @pl.when(j == pl.num_programs(1) - 1)
        def _():
            eps = jnp.float32(1e-6)
            bce_out_ref[...] = bce_acc[...] * jnp.float32(inv_hw)   # mean over H*W
            numer = 2.0 * st_acc[...]
            denom = s_acc[...] + t_acc[...]
            dice_out_ref[...] = 1.0 - (numer + eps) / (denom + eps)

    return kernel


def _per_mask_losses(pred2, gt2):
    """pred2, gt2: (N, HW) float32.  Returns (bce_mean (N,), dice (N,)) per mask."""
    n, hw = pred2.shape

    hw_pad128 = _round_up(hw, 128)
    tcol = min(hw_pad128, 32768)            # lane-dense column tile
    hw_pad = _round_up(hw, tcol)

    # Grow the row tile while the double-buffered per-step working set stays under
    # ~8 MiB (2 inputs x 2 buffers x tn x tcol x 4B) and padding waste stays bounded
    # by round_up(n, 8).
    tn = 8
    max_tn = min(_round_up(n, 8), 256)
    while tn * 2 <= max_tn and (tn * 2) * tcol * 16 <= (8 << 20):
        tn *= 2
    n_pad = _round_up(n, tn)

    if n_pad != n or hw_pad != hw:
        pred2 = jnp.pad(pred2, ((0, n_pad - n), (0, hw_pad - hw)))
        gt2 = jnp.pad(gt2, ((0, n_pad - n), (0, hw_pad - hw)))

    kernel = _make_mask_loss_kernel(hw, tcol, need_mask=(hw_pad != hw))

    bce, dice = pl.pallas_call(
        kernel,
        out_shape=(jax.ShapeDtypeStruct((n_pad, 1), jnp.float32),
                   jax.ShapeDtypeStruct((n_pad, 1), jnp.float32)),
        grid=(n_pad // tn, hw_pad // tcol),
        in_specs=[
            pl.BlockSpec((tn, tcol), lambda i, j: (i, j)),
            pl.BlockSpec((tn, tcol), lambda i, j: (i, j)),
        ],
        out_specs=(
            pl.BlockSpec((tn, 1), lambda i, j: (i, 0)),
            pl.BlockSpec((tn, 1), lambda i, j: (i, 0)),
        ),
        scratch_shapes=[pltpu.VMEM((tn, 1), jnp.float32)] * 4,
        compiler_params=pltpu.CompilerParams(
            dimension_semantics=("parallel", "arbitrary")),
    )(pred2, gt2)
    return bce[:n, 0], dice[:n, 0]


def uniref_sam_mask_losses(pred_masks, gt_masks, bce_loss_weight=2.0,
                           dice_loss_weight=0.5):
    """Training-branch loss aggregation of UniRef_Sam.forward (one fused pallas_call)."""
    flat_p, flat_g, counts, hws = [], [], [], []
    for pred, gt in zip(pred_masks, gt_masks):
        n, h, w = pred.shape
        assert gt.shape[0] == n
        flat_p.append(pred.reshape(n, h * w).astype(jnp.float32))
        flat_g.append(gt.reshape(n, h * w).astype(jnp.float32))
        counts.append(n)
        hws.append(h * w)

    if len(set(hws)) == 1:
        # All masks share H*W (the usual SAM case): one pallas_call for the whole batch.
        bce_pm, dice_pm = _per_mask_losses(jnp.concatenate(flat_p, axis=0),
                                           jnp.concatenate(flat_g, axis=0))
        bce_list, dice_list, off = [], [], 0
        for n in counts:
            bce_list.append(bce_pm[off:off + n])
            dice_list.append(dice_pm[off:off + n])
            off += n
    else:
        # TODO(synk): images with different mask resolutions fall back to one call each.
        bce_list, dice_list = [], []
        for p2, g2 in zip(flat_p, flat_g):
            b, d = _per_mask_losses(p2, g2)
            bce_list.append(b)
            dice_list.append(d)

    mask_bce_loss = jnp.float32(0.0)
    mask_dice_loss = jnp.float32(0.0)
    num_masks = 0
    for n, b, d in zip(counts, bce_list, dice_list):
        mask_bce_loss = mask_bce_loss + (jnp.sum(b) / (n + 1e-8)) * n
        mask_dice_loss = mask_dice_loss + (jnp.sum(d) / (n + 1e-8)) * n
        num_masks += n
    mask_bce_loss = bce_loss_weight * mask_bce_loss / (num_masks + 1e-8)
    mask_dice_loss = dice_loss_weight * mask_dice_loss / (num_masks + 1e-8)
    return {"mask_bce_loss": mask_bce_loss, "mask_dice_loss": mask_dice_loss}


# -----------------------------------------------------------------------------
# Pure-JAX references (correctness check only)
# -----------------------------------------------------------------------------
def _ref_resizer(x, w, b, g, beta):
    y = x.astype(jnp.float32) @ w.astype(jnp.float32) + b
    mu = y.mean(-1, keepdims=True)
    var = ((y - mu) ** 2).mean(-1, keepdims=True)
    return (y - mu) / jnp.sqrt(var + 1e-12) * g + beta


def _ref_losses(pred_masks, gt_masks, bce_w=2.0, dice_w=0.5):
    bce_tot, dice_tot, num = 0.0, 0.0, 0
    for pred, gt in zip(pred_masks, gt_masks):
        n = gt.shape[0]
        x = pred.reshape(n, -1).astype(jnp.float32)
        t = gt.reshape(n, -1).astype(jnp.float32)
        bce = jnp.maximum(x, 0.0) - x * t + jnp.log1p(jnp.exp(-jnp.abs(x)))
        bce_b = bce.mean(1).sum() / (n + 1e-8)
        sig = jax.nn.sigmoid(x)
        numer = 2.0 * ((sig / 1000.0) * t).sum(-1)
        denom = (sig / 1000.0).sum(-1) + (t / 1000.0).sum(-1)
        dice_b = (1.0 - (numer + 1e-6) / (denom + 1e-6)).sum() / (n + 1e-8)
        bce_tot += bce_b * n
        dice_tot += dice_b * n
        num += n
    return {"mask_bce_loss": bce_w * bce_tot / (num + 1e-8),
            "mask_dice_loss": dice_w * dice_tot / (num + 1e-8)}


# -----------------------------------------------------------------------------
if __name__ == "__main__":
    key = jax.random.PRNGKey(0)
    k1, k2, k3, k4, k5, k6, k7, k8, k9 = jax.random.split(key, 9)

    # ---- FeatureResizer: LANG_DIM=128 -> embed_dim=256, context_len L=20 ----
    L, C1, C2 = 20, 128, 256
    lang_feats = jax.random.normal(k1, (L, C1), jnp.float32)
    fc_w = jax.random.normal(k2, (C1, C2), jnp.float32) * 0.02   # (C_in, C_out)
    fc_b = jax.random.normal(k3, (C2,), jnp.float32) * 0.01
    ln_g = jnp.ones((C2,), jnp.float32)
    ln_b = jnp.zeros((C2,), jnp.float32)

    resized = jax.block_until_ready(feature_resizer(lang_feats, fc_w, fc_b, ln_g, ln_b))
    ref_resized = _ref_resizer(lang_feats, fc_w, fc_b, ln_g, ln_b)
    assert jnp.allclose(resized, ref_resized, atol=1e-3, rtol=1e-3), "resizer mismatch"

    # ---- mask losses (batched, single pallas_call): 2 images, 2 + 3 masks, 32x32 ----
    H = W = 32
    pred_masks = [
        jax.random.normal(k4, (2, H, W), jnp.float32) * 3.0,
        jax.random.normal(k5, (3, H, W), jnp.float32) * 3.0,
    ]
    gt_masks = [
        (jax.random.uniform(k6, (2, H, W)) > 0.5).astype(jnp.float32),
        (jax.random.uniform(k7, (3, H, W)) > 0.5).astype(jnp.float32),
    ]
    loss_dict = uniref_sam_mask_losses(pred_masks, gt_masks)
    loss_dict = jax.tree_util.tree_map(jax.block_until_ready, loss_dict)
    ref_loss = _ref_losses(pred_masks, gt_masks)
    assert jnp.allclose(loss_dict["mask_bce_loss"], ref_loss["mask_bce_loss"],
                        atol=1e-4, rtol=1e-4), "bce loss mismatch"
    assert jnp.allclose(loss_dict["mask_dice_loss"], ref_loss["mask_dice_loss"],
                        atol=1e-4, rtol=1e-4), "dice loss mismatch"

    # ---- second loss case: H*W not a multiple of 128 (exercises the column mask) ----
    H2 = W2 = 24
    pred_masks2 = [
        jax.random.normal(k8, (2, H2, W2), jnp.float32) * 3.0,
        jax.random.normal(k9, (1, H2, W2), jnp.float32) * 3.0,
    ]
    gt_masks2 = [
        (jax.random.uniform(k6, (2, H2, W2)) > 0.5).astype(jnp.float32),
        (jax.random.uniform(k7, (1, H2, W2)) > 0.5).astype(jnp.float32),
    ]
    loss_dict2 = uniref_sam_mask_losses(pred_masks2, gt_masks2)
    loss_dict2 = jax.tree_util.tree_map(jax.block_until_ready, loss_dict2)
    ref_loss2 = _ref_losses(pred_masks2, gt_masks2)
    assert jnp.allclose(loss_dict2["mask_bce_loss"], ref_loss2["mask_bce_loss"],
                        atol=1e-4, rtol=1e-4), "bce loss mismatch (padded HW)"
    assert jnp.allclose(loss_dict2["mask_dice_loss"], ref_loss2["mask_dice_loss"],
                        atol=1e-4, rtol=1e-4), "dice loss mismatch (padded HW)"

    print("KERNEL_OK")
</pallas_src>

<mosaic_0001>
module attributes {stable_mosaic.version = 11 : i64} {
  func.func @_resizer_kernel(%arg0: i32, %arg1: memref<24x128xf32, #tpu.memory_space<vmem>>, %arg2: memref<128x256xf32, #tpu.memory_space<vmem>>, %arg3: memref<3x256xf32, #tpu.memory_space<vmem>>, %arg4: memref<24x256xf32, #tpu.memory_space<vmem>>) attributes {dimension_semantics = [#tpu.dimension_semantics<parallel>], iteration_bounds = array<i64: 1>, scalar_prefetch = 0 : i64, scratch_operands = 0 : i64, tpu.core_type = #tpu.core_type<tc>, window_params = [{transform_indices = @transform_0, window_bounds = array<i64: 24, 128>}, {pipeline_mode = #tpu.pipeline_mode<synchronous>, transform_indices = @transform_1, window_bounds = array<i64: 128, 256>}, {pipeline_mode = #tpu.pipeline_mode<synchronous>, transform_indices = @transform_2, window_bounds = array<i64: 3, 256>}, {transform_indices = @transform_3, window_bounds = array<i64: 24, 256>}]} {
    %c0 = arith.constant 0 : index
    %c0_0 = arith.constant 0 : index
    %0 = vector.load %arg1[%c0, %c0_0] : memref<24x128xf32, #tpu.memory_space<vmem>>, vector<24x128xf32>
    %c0_1 = arith.constant 0 : index
    %c0_2 = arith.constant 0 : index
    %1 = vector.load %arg2[%c0_1, %c0_2] : memref<128x256xf32, #tpu.memory_space<vmem>>, vector<128x256xf32>
    %cst = arith.constant dense<0.000000e+00> : vector<24x256xf32>
    %2 = tpu.matmul %0, %1, %cst {dimension_numbers = #tpu.dot_dimension_numbers<[1], [0], [0], [1], [0, 0, 1, 1], [], []>} : vector<24x128xf32>, vector<128x256xf32>, vector<24x256xf32> -> vector<24x256xf32>
    %c0_3 = arith.constant 0 : index
    %c0_4 = arith.constant 0 : index
    %3 = vector.load %arg3[%c0_3, %c0_4] : memref<3x256xf32, #tpu.memory_space<vmem>>, vector<3x256xf32>
    %4 = vector.extract_strided_slice %3 {offsets = [0, 0], sizes = [1, 256], strides = [1, 1]} : vector<3x256xf32> to vector<1x256xf32>
    %5 = vector.broadcast %4 : vector<1x256xf32> to vector<24x256xf32>
    %6 = arith.addf %2, %5 : vector<24x256xf32>
    %cst_5 = arith.constant dense<0.000000e+00> : vector<24xf32>
    %7 = vector.multi_reduction <add>, %6, %cst_5 [1] : vector<24x256xf32> to vector<24xf32>
    %8 = vector.shape_cast %7 : vector<24xf32> to vector<24x1xf32>
    %cst_6 = arith.constant 2.560000e+02 : f32
    %9 = vector.broadcast %cst_6 : f32 to vector<24x1xf32>
    %10 = arith.divf %8, %9 : vector<24x1xf32>
    %11 = vector.broadcast %10 : vector<24x1xf32> to vector<24x256xf32>
    %12 = arith.subf %6, %11 : vector<24x256xf32>
    %13 = arith.mulf %12, %12 : vector<24x256xf32>
    %cst_7 = arith.constant dense<0.000000e+00> : vector<24xf32>
    %14 = vector.multi_reduction <add>, %13, %cst_7 [1] : vector<24x256xf32> to vector<24xf32>
    %15 = vector.shape_cast %14 : vector<24xf32> to vector<24x1xf32>
    %cst_8 = arith.constant 2.560000e+02 : f32
    %16 = vector.broadcast %cst_8 : f32 to vector<24x1xf32>
    %17 = arith.divf %15, %16 : vector<24x1xf32>
    %18 = vector.broadcast %10 : vector<24x1xf32> to vector<24x256xf32>
    %19 = arith.subf %6, %18 : vector<24x256xf32>
    %cst_9 = arith.constant 9.99999996E-13 : f32
    %20 = vector.broadcast %cst_9 : f32 to vector<24x1xf32>
    %21 = arith.addf %17, %20 : vector<24x1xf32>
    %22 = math.rsqrt %21 : vector<24x1xf32>
    %23 = vector.broadcast %22 : vector<24x1xf32> to vector<24x256xf32>
    %24 = arith.mulf %19, %23 : vector<24x256xf32>
    %25 = vector.extract_strided_slice %3 {offsets = [1, 0], sizes = [1, 256], strides = [1, 1]} : vector<3x256xf32> to vector<1x256xf32>
    %26 = vector.broadcast %25 : vector<1x256xf32> to vector<24x256xf32>
    %27 = arith.mulf %24, %26 : vector<24x256xf32>
    %28 = vector.extract_strided_slice %3 {offsets = [2, 0], sizes = [1, 256], strides = [1, 1]} : vector<3x256xf32> to vector<1x256xf32>
    %29 = vector.broadcast %28 : vector<1x256xf32> to vector<24x256xf32>
    %30 = arith.addf %27, %29 : vector<24x256xf32>
    %c0_10 = arith.constant 0 : index
    %c0_11 = arith.constant 0 : index
    %31 = vector.load %arg4[%c0_10, %c0_11] : memref<24x256xf32, #tpu.memory_space<vmem>>, vector<24x256xf32>
    tpu.vector_store %arg4[%c0_10, %c0_11], %30 {strides = array<i32>} : memref<24x256xf32, #tpu.memory_space<vmem>>, vector<24x256xf32>,
    return
  }
  func.func @transform_0(%arg0: i32) -> (i32, i32) {
    %c0_i32 = arith.constant 0 : i32
    %c0_i32_0 = arith.constant 0 : i32
    return %arg0, %c0_i32 : i32, i32
  }
  func.func @transform_1(%arg0: i32) -> (i32, i32) {
    %c0_i32 = arith.constant 0 : i32
    %c0_i32_0 = arith.constant 0 : i32
    %c0_i32_1 = arith.constant 0 : i32
    return %c0_i32, %c0_i32_0 : i32, i32
  }
  func.func @transform_2(%arg0: i32) -> (i32, i32) {
    %c0_i32 = arith.constant 0 : i32
    %c0_i32_0 = arith.constant 0 : i32
    %c0_i32_1 = arith.constant 0 : i32
    return %c0_i32, %c0_i32_0 : i32, i32
  }
  func.func @transform_3(%arg0: i32) -> (i32, i32) {
    %c0_i32 = arith.constant 0 : i32
    %c0_i32_0 = arith.constant 0 : i32
    return %arg0, %c0_i32 : i32, i32
  }
}

</mosaic_0001>

<llo_original>
// kernel: tpu_custom_call.1
$region0: #{tpu_custom_call.1}
  #allocation0 [shape = 'u32[]', space=smem, size = 0x4, offset = 0x4, fixed_abs, tag = 'smem constant byte address 0x4 - core index']
  #allocation1 [shape = 'u32[144,128]{1,0:T(1,128)}', space=vmem, size = 0x12000, scoped, tag = 'internal scratch']
  %s0 = inlined_call_operand.hbm [shape: f32[24,128], index: 0, kind: input, shape index: {}]
  %s1 = inlined_call_operand.hbm [shape: f32[128,256], index: 1, kind: input, shape index: {}]
  %s2 = inlined_call_operand.hbm [shape: f32[3,256], index: 2, kind: input, shape index: {}]
  %s3 = inlined_call_operand.hbm [shape: f32[24,256], index: 3, kind: output, shape index: {}]
  %s4 = sld [smem:[#allocation0]]
  $region34: #{tpu_custom_call.1} parent=0
    _
  %s6 = ssub.s32 1, %s4
  %s7 = scalar_select 0, %s6, %s4
  $region1: #{tpu_custom_call.1} parent=0
    #allocation2 [shape = 'u8[12288]{0}', space=vmem, size = 0x3000, scoped, tag = 'input window, operand 0, single buffered']
    #allocation3 [shape = 's32[1]{0}', space=sflag, size = 0x4, scoped, tag = 'scoped memory for tpu_custom_call.1']
    #allocation4 [shape = 's32[1]{0}', space=sflag, size = 0x4, scoped, tag = 'scoped memory for tpu_custom_call.1']
    #allocation5 [shape = 'u8[131072]{0}', space=vmem, size = 0x20000, scoped, tag = 'input window, operand 1, single buffered']
    #allocation6 [shape = 's32[1]{0}', space=sflag, size = 0x4, scoped, tag = 'scoped memory for tpu_custom_call.1']
    #allocation7 [shape = 'u8[4096]{0}', space=vmem, size = 0x1000, scoped, tag = 'input window, operand 2, single buffered']
    #allocation8 [shape = 'u8[24576]{0}', space=vmem, size = 0x6000, scoped, tag = 'output window, operand 0, single buffered']
    %8 = vsyncpa [#allocation3], 0
    %9 = vsyncpa [#allocation6], 0
    %10 = vsyncpa [#allocation4], 0
    // Predicated region
    $region2: #{tpu_custom_call.1} parent=1 // pred_check
      _
    $region3: #{tpu_custom_call.1} parent=1 // pred_check_branch
      %12 = sbr.rel (0) target = $region5
    $region4: #{tpu_custom_call.1} parent=1 // pred_region
      %s14 = ssub.s32 384, 384
      %15 = vsyncadd [#allocation3], %s14
      %s16 = sshll.u32 [#allocation2], 4
      %s17 = int_to_ptr.vmem [resolvable:$true] %s16
      %22 = dma.hbm_to_vmem [thread:$0]  %s0, 384, %s17, [#allocation3], 128, 128, 8
    $region5: #{tpu_custom_call.1} parent=1 // pred_fallthru
      _
    // Predicated region
    $region6: #{tpu_custom_call.1} parent=1 // pred_check
      _
    $region7: #{tpu_custom_call.1} parent=1 // pred_check_branch
      %24 = sbr.rel (0) target = $region9
    $region8: #{tpu_custom_call.1} parent=1 // pred_region
      %s26 = ssub.s32 4096, 4096
      %27 = vsyncadd [#allocation6], %s26
      %s28 = sshll.u32 [#allocation5], 4
      %s29 = int_to_ptr.vmem [resolvable:$true] %s28
      %34 = dma.hbm_to_vmem [thread:$0]  %s1, 4096, %s29, [#allocation6], 256, 256, 16
    $region9: #{tpu_custom_call.1} parent=1 // pred_fallthru
      _
    // Predicated region
    $region10: #{tpu_custom_call.1} parent=1 // pred_check
      _
    $region11: #{tpu_custom_call.1} parent=1 // pred_check_branch
      %36 = sbr.rel (0) target = $region13
    $region12: #{tpu_custom_call.1} parent=1 // pred_region
      %s38 = ssub.s32 128, 128
      %39 = vsyncadd [#allocation6], %s38
      %s41 = sshll.u32 [#allocation7], 4
      %s42 = int_to_ptr.vmem [resolvable:$true] %s41
      %44 = dma.hbm_to_vmem [thread:$0]  %s2, 128, %s42, [#allocation6]
    $region13: #{tpu_custom_call.1} parent=1 // pred_fallthru
      _
    // Predicated region
    $region14: #{tpu_custom_call.1} parent=1 // pred_check
      _
    $region15: #{tpu_custom_call.1} parent=1 // pred_check_branch
      %46 = sbr.rel (0) target = $region17
    $region16: #{tpu_custom_call.1} parent=1 // pred_region
      %47 = dma.done [#allocation3], 384
    $region17: #{tpu_custom_call.1} parent=1 // pred_fallthru
      _
    // Predicated region
    $region18: #{tpu_custom_call.1} parent=1 // pred_check
      _
    $region19: #{tpu_custom_call.1} parent=1 // pred_check_branch
      %49 = sbr.rel (0) target = $region21
    $region20: #{tpu_custom_call.1} parent=1 // pred_region
      %50 = dma.done [#allocation6], 4096
    $region21: #{tpu_custom_call.1} parent=1 // pred_fallthru
      _
    // Predicated region
    $region22: #{tpu_custom_call.1} parent=1 // pred_check
      _
    $region23: #{tpu_custom_call.1} parent=1 // pred_check_branch
      %52 = sbr.rel (0) target = $region25
    $region24: #{tpu_custom_call.1} parent=1 // pred_region
      %53 = dma.done [#allocation6], 128
    $region25: #{tpu_custom_call.1} parent=1 // pred_fallthru
      _
    %v54 = vld [vmem:[#allocation2] sm:$0xff]
    %v55 = vld [vmem:[#allocation2 + $0x8] sm:$0xff]
    %v56 = vld [vmem:[#allocation2 + $0x10] sm:$0xff]
    %v57 = vld [vmem:[#allocation5] sm:$0xff]
    %v58 = vld [vmem:[#allocation5 + $0x8] sm:$0xff]
    %v59 = vld [vmem:[#allocation5 + $0x10] sm:$0xff]
    %v60 = vld [vmem:[#allocation5 + $0x18] sm:$0xff]
    %v61 = vld [vmem:[#allocation5 + $0x20] sm:$0xff]
    %v62 = vld [vmem:[#allocation5 + $0x28] sm:$0xff]
    %v63 = vld [vmem:[#allocation5 + $0x30] sm:$0xff]
    %v64 = vld [vmem:[#allocation5 + $0x38] sm:$0xff]
    %v65 = vld [vmem:[#allocation5 + $0x40] sm:$0xff]
    %v66 = vld [vmem:[#allocation5 + $0x48] sm:$0xff]
    %v67 = vld [vmem:[#allocation5 + $0x50] sm:$0xff]
    %v68 = vld [vmem:[#allocation5 + $0x58] sm:$0xff]
    %v69 = vld [vmem:[#allocation5 + $0x60] sm:$0xff]
    %v70 = vld [vmem:[#allocation5 + $0x68] sm:$0xff]
    %v71 = vld [vmem:[#allocation5 + $0x70] sm:$0xff]
    %v72 = vld [vmem:[#allocation5 + $0x78] sm:$0xff]
    %v73 = vld [vmem:[#allocation5 + $0x80] sm:$0xff]
    %v74 = vld [vmem:[#allocation5 + $0x88] sm:$0xff]
    %v75 = vld [vmem:[#allocation5 + $0x90] sm:$0xff]
    %v76 = vld [vmem:[#allocation5 + $0x98] sm:$0xff]
    %v77 = vld [vmem:[#allocation5 + $0xa0] sm:$0xff]
    %v78 = vld [vmem:[#allocation5 + $0xa8] sm:$0xff]
    %v79 = vld [vmem:[#allocation5 + $0xb0] sm:$0xff]
    %v80 = vld [vmem:[#allocation5 + $0xb8] sm:$0xff]
    %v81 = vld [vmem:[#allocation5 + $0xc0] sm:$0xff]
    %v82 = vld [vmem:[#allocation5 + $0xc8] sm:$0xff]
    %v83 = vld [vmem:[#allocation5 + $0xd0] sm:$0xff]
    %v84 = vld [vmem:[#allocation5 + $0xd8] sm:$0xff]
    %v85 = vld [vmem:[#allocation5 + $0xe0] sm:$0xff]
    %v86 = vld [vmem:[#allocation5 + $0xe8] sm:$0xff]
    %v87 = vld [vmem:[#allocation5 + $0xf0] sm:$0xff]
    %v88 = vld [vmem:[#allocation5 + $0xf8] sm:$0xff]
    %v89 = vld [vmem:[#allocation7] sm:$0x77]
    %v91 = vlaneseq
    %v92 = vshrl.u32 %v91, 7
    %v93 = vsub.s32 0, %v92
    %v94 = vrot.slane %v89, %v93
    %v95 = vlaneseq
    %v96 = vshrl.u32 %v95, 7
    %v97 = vsub.s32 4, %v96
    %v98 = vrot.slane %v89, %v97
    %v101 = vlaneseq
    %v102 = vshrl.u32 %v101, 7
    %v103 = vsub.s32 0, %v102
    %v104 = vrot.slane %v94, %v103
    %v105 = vlaneseq
    %v106 = vshrl.u32 %v105, 7
    %v107 = vsub.s32 0, %v106
    %v108 = vrot.slane %v98, %v107
    %109 = vmatprep.subr.mxu0 %v58
    %110 = vmatpush1.msra.mxu0 %v57
    %111 = vmatprep.subr.mxu0 %v60
    %112 = vmatpush1.msra.mxu0 %v59
    %113 = vmatprep.subr.mxu0 %v62
    %114 = vmatpush1.msra.mxu0 %v61
    %115 = vmatprep.subr.mxu0 %v64
    %116 = vmatpush1.msra.mxu0 %v63
    %117 = vmatprep.subr.mxu0 %v66
    %118 = vmatpush1.msra.mxu0 %v65
    %119 = vmatprep.subr.mxu0 %v68
    %120 = vmatpush1.msra.mxu0 %v67
    %121 = vmatprep.subr.mxu0 %v70
    %122 = vmatpush1.msra.mxu0 %v69
    %123 = vmatprep.subr.mxu0 %v72
    %124 = vmatpush1.msra.mxu0 %v71
    %125 = vmatprep.subr.mxu0 %v74
    %126 = vmatpush1.msra.mxu0 %v73
    %127 = vmatprep.subr.mxu0 %v76
    %128 = vmatpush1.msra.mxu0 %v75
    %129 = vmatprep.subr.mxu0 %v78
    %130 = vmatpush1.msra.mxu0 %v77
    %131 = vmatprep.subr.mxu0 %v80
    %132 = vmatpush1.msra.mxu0 %v79
    %133 = vmatprep.subr.mxu0 %v82
    %134 = vmatpush1.msra.mxu0 %v81
    %135 = vmatprep.subr.mxu0 %v84
    %136 = vmatpush1.msra.mxu0 %v83
    %137 = vmatprep.subr.mxu0 %v86
    %138 = vmatpush1.msra.mxu0 %v85
    %139 = vmatprep.subr.mxu0 %v88
    %140 = vmatpush1.msra.mxu0 %v87
    %141 = vmatprep.subr.mxu0 0.0
    %142 = vmatpush1.msra.mxu0 0.0
    %143 = vmatprep.subr.mxu0 0.0
    %144 = vmatpush1.msra.mxu0 0.0
    %145 = vmatprep.subr.mxu0 0.0
    %146 = vmatpush1.msra.mxu0 0.0
    %147 = vmatprep.subr.mxu0 0.0
    %148 = vmatpush1.msra.mxu0 0.0
    %149 = vmatprep.subr.mxu0 0.0
    %150 = vmatpush1.msra.mxu0 0.0
    %151 = vmatprep.subr.mxu0 0.0
    %152 = vmatpush1.msra.mxu0 0.0
    %153 = vmatprep.subr.mxu0 0.0
    %154 = vmatpush1.msra.mxu0 0.0
    %155 = vmatprep.subr.mxu0 0.0
    %156 = vmatpush1.msra.mxu0 0.0
    %157 = vmatprep.subr.mxu0 0.0
    %158 = vmatpush1.msra.mxu0 0.0
    %159 = vmatprep.subr.mxu0 0.0
    %160 = vmatpush1.msra.mxu0 0.0
    %161 = vmatprep.subr.mxu0 0.0
    %162 = vmatpush1.msra.mxu0 0.0
    %163 = vmatprep.subr.mxu0 0.0
    %164 = vmatpush1.msra.mxu0 0.0
    %165 = vmatprep.subr.mxu0 0.0
    %166 = vmatpush1.msra.mxu0 0.0
    %167 = vmatprep.subr.mxu0 0.0
    %168 = vmatpush1.msra.mxu0 0.0
    %169 = vmatprep.subr.mxu0 0.0
    %170 = vmatpush1.msra.mxu0 0.0
    %171 = vmatprep.subr.mxu0 0.0
    %172 = vmatpush1.msra.mxu0 0.0
    %173 = vmatprep.mubr.f32.mxu0 0.0
    %174 = vmatmul.mubr.f32.gmra.mrb[0].mxu0 %v54
    %v175 = vpop.f32.mrb[0].mxu0
    %v176 = vadd.f32 %v104, %v175
    %v177 = vpop.f32.mrb[0].mxu0
    %v178 = vadd.f32 %v108, %v177
    %179 = vmatprep.mubr.f32.mxu0 0.0
    %180 = vmatmul.mubr.f32.gmra.mrb[0].mxu0 %v55
    %v181 = vpop.f32.mrb[0].mxu0
    %v182 = vadd.f32 %v104, %v181
    %v183 = vpop.f32.mrb[0].mxu0
    %v184 = vadd.f32 %v108, %v183
    %185 = vmatprep.mubr.f32.mxu0 0.0
    %186 = vmatmul.mubr.f32.gmra.mrb[0].mxu0 %v56
    %v187 = vpop.f32.mrb[0].mxu0
    %v188 = vadd.f32 %v104, %v187
    %v189 = vpop.f32.mrb[0].mxu0
    %v190 = vadd.f32 %v108, %v189
    %191 = vdwg.mxu0
    %v192 = vadd.f32 %v176, %v178
    %193 = vadd.xlane.f32.xlu0 %v192
    %v194 = vpop.xlane.xlu0 %193
    %v195 = vadd.f32 %v182, %v184
    %196 = vadd.xlane.f32.xlu0 %v195
    %v197 = vpop.xlane.xlu0 %196
    %v198 = vadd.f32 %v188, %v190
    %199 = vadd.xlane.f32.xlu0 %v198
    %v200 = vpop.xlane.xlu0 %199
    %v201 = vrcp.pop 256.0
    %v202 = vmul.f32 %v194, %v201
    %v203 = vmul.f32 %v197, %v201
    %v204 = vmul.f32 %v200, %v201
    %v205 = vsub.f32 %v176, %v202
    %v206 = vsub.f32 %v178, %v202
    %v207 = vsub.f32 %v182, %v203
    %v208 = vsub.f32 %v184, %v203
    %v209 = vsub.f32 %v188, %v204
    %v210 = vsub.f32 %v190, %v204
    %v211 = vmul.f32 %v205, %v205
    %v212 = vmul.f32 %v206, %v206
    %v213 = vmul.f32 %v207, %v207
    %v214 = vmul.f32 %v208, %v208
    %v215 = vmul.f32 %v209, %v209
    %v216 = vmul.f32 %v210, %v210
    %v217 = vadd.f32 %v211, %v212
    %218 = vadd.xlane.f32.xlu0 %v217
    %v219 = vpop.xlane.xlu0 %218
    %v220 = vadd.f32 %v213, %v214
    %221 = vadd.xlane.f32.xlu0 %v220
    %v222 = vpop.xlane.xlu0 %221
    %v223 = vadd.f32 %v215, %v216
    %224 = vadd.xlane.f32.xlu0 %v223
    %v225 = vpop.xlane.xlu0 %224
    %v226 = vmul.f32 %v219, %v201
    %v227 = vmul.f32 %v222, %v201
    %v228 = vmul.f32 %v225, %v201
    %v229 = vadd.f32 %v226, 1e-12
    %v230 = vadd.f32 %v227, 1e-12
    %v231 = vadd.f32 %v228, 1e-12
    %v232 = vrsqrt.pop %v229
    %v233 = vrsqrt.pop %v230
    %v234 = vrsqrt.pop %v231
    %v235 = vmul.f32 %v205, %v232
    %v236 = vmul.f32 %v206, %v232
    %v237 = vmul.f32 %v207, %v233
    %v238 = vmul.f32 %v208, %v233
    %v239 = vmul.f32 %v209, %v234
    %v240 = vmul.f32 %v210, %v234
    %v241 = vlaneseq
    %v242 = vshrl.u32 %v241, 7
    %v243 = vsub.s32 1, %v242
    %v244 = vrot.slane %v89, %v243
    %v245 = vlaneseq
    %v246 = vshrl.u32 %v245, 7
    %v247 = vsub.s32 5, %v246
    %v248 = vrot.slane %v89, %v247
    %v251 = vlaneseq
    %v252 = vshrl.u32 %v251, 7
    %v253 = vsub.s32 1, %v252
    %v254 = vrot.slane %v244, %v253
    %v255 = vlaneseq
    %v256 = vshrl.u32 %v255, 7
    %v257 = vsub.s32 1, %v256
    %v258 = vrot.slane %v248, %v257
    %v259 = vmul.f32 %v235, %v254
    %v260 = vmul.f32 %v236, %v258
    %v261 = vmul.f32 %v237, %v254
    %v262 = vmul.f32 %v238, %v258
    %v263 = vmul.f32 %v239, %v254
    %v264 = vmul.f32 %v240, %v258
    %v265 = vlaneseq
    %v266 = vshrl.u32 %v265, 7
    %v267 = vsub.s32 2, %v266
    %v268 = vrot.slane %v89, %v267
    %v269 = vlaneseq
    %v270 = vshrl.u32 %v269, 7
    %v271 = vsub.s32 6, %v270
    %v272 = vrot.slane %v89, %v271
    %v275 = vlaneseq
    %v276 = vshrl.u32 %v275, 7
    %v277 = vsub.s32 2, %v276
    %v278 = vrot.slane %v268, %v277
    %v279 = vlaneseq
    %v280 = vshrl.u32 %v279, 7
    %v281 = vsub.s32 2, %v280
    %v282 = vrot.slane %v272, %v281
    %v283 = vadd.f32 %v259, %v278
    %v284 = vadd.f32 %v260, %v282
    %v285 = vadd.f32 %v261, %v278
    %v286 = vadd.f32 %v262, %v282
    %v287 = vadd.f32 %v263, %v278
    %v288 = vadd.f32 %v264, %v282
    %289 = vst [vmem:[#allocation8] sm:$0xff] %v283
    %290 = vst [vmem:[#allocation8 + $0x8] sm:$0xff] %v284
    %291 = vst [vmem:[#allocation8 + $0x10] sm:$0xff] %v285
    %292 = vst [vmem:[#allocation8 + $0x18] sm:$0xff] %v286
    %293 = vst [vmem:[#allocation8 + $0x20] sm:$0xff] %v287
    %294 = vst [vmem:[#allocation8 + $0x28] sm:$0xff] %v288
    // Predicated region
    $region26: #{tpu_custom_call.1} parent=1 // pred_check
      _
    $region27: #{tpu_custom_call.1} parent=1 // pred_check_branch
      %296 = sbr.rel (0) target = $region29
    $region28: #{tpu_custom_call.1} parent=1 // pred_region
      %s298 = ssub.s32 768, 768
      %299 = vsyncadd [#allocation4], %s298
      %s300 = sshll.u32 [#allocation8], 4
      %s301 = int_to_ptr.vmem [resolvable:$true] %s300
      %306 = dma.vmem_to_hbm [thread:$0]  %s301, 768, %s3, [#allocation4], 256, 256, 16
    $region29: #{tpu_custom_call.1} parent=1 // pred_fallthru
      _
    // Predicated region
    $region30: #{tpu_custom_call.1} parent=1 // pred_check
      _
    $region31: #{tpu_custom_call.1} parent=1 // pred_check_branch
      %308 = sbr.rel (0) target = $region33
    $region32: #{tpu_custom_call.1} parent=1 // pred_region
      %309 = dma.done [#allocation4], 768
    $region33: #{tpu_custom_call.1} parent=1 // pred_fallthru
      _
    %310 = vsyncpa [#allocation3], 1
    %311 = vsyncpa [#allocation6], 1
    %312 = vsyncpa [#allocation4], 1

</llo_original>
